<compile_context>
chip_gen: v7x
topology: tpu7x:2x2x1
jax: 0.10.0
libtpu: 0.0.40
codegen_flags: <defaults>
</compile_context>

<pallas_src>
import jax
import jax.numpy as jnp
from jax.experimental import pallas as pl
from jax.experimental.pallas import tpu as pltpu


# ----------------------------------------------------------------------------
# Pallas kernel: one lane-dense row tile of  y = x @ W  on the MXU
# ----------------------------------------------------------------------------
def _invertible_mm_kernel(x_ref, w_ref, y_ref):
    y_ref[...] = jnp.dot(
        x_ref[...], w_ref[...], preferred_element_type=jnp.float32
    ).astype(y_ref.dtype)


# ----------------------------------------------------------------------------
# Helpers
# ----------------------------------------------------------------------------
def _round_up(x, m):
    return ((x + m - 1) // m) * m


def _physical_vmem_bytes():
    try:
        return int(pltpu.get_tpu_info().vmem_capacity_bytes)
    except Exception:
        return 64 << 20  # v7x per-TensorCore size: safe lower bound everywhere


def precompute_invertible_mm(W, mode='direct'):
    """Per-parameter precompute (cacheable across forward calls).

    TODO(synk): torch.det / torch.inverse (LU-based) have no Pallas
    equivalent; this tiny (D, D) work runs once in XLA.
    """
    W32 = W.astype(jnp.float32)
    _, logabsdet = jnp.linalg.slogdet(W32)
    if mode == 'direct':
        return W32, logabsdet
    return jnp.linalg.inv(W32), -logabsdet


# ----------------------------------------------------------------------------
# Wrapper: lane-dense repack + batch-tiled pallas_call
# ----------------------------------------------------------------------------
def invertible_mm_forward(inputs, W, mode='direct', *, block_rows=None,
                          precomputed=None):
    assert inputs.ndim == 2, "expected [B, num_inputs]"
    B, D = inputs.shape
    assert W.shape == (D, D)

    if precomputed is None:
        w_eff, logdet_scalar = precompute_invertible_mm(W, mode)
    else:
        w_eff, logdet_scalar = precomputed

    # bf16 I/O path: keep caller's activation dtype (halves HBM bytes for this
    # bandwidth-bound op); everything else runs in f32.
    io_dtype = jnp.bfloat16 if inputs.dtype == jnp.bfloat16 else jnp.float32
    x = inputs.astype(io_dtype)
    w_eff = w_eff.astype(io_dtype)
    itemsize = jnp.dtype(io_dtype).itemsize
    align = {4: 8, 2: 16, 1: 32}.get(itemsize, 8)  # sublane granularity

    # ---- lane-dense repack for small D --------------------------------------
    if D < 128 and 128 % D == 0:
        f = 128 // D
        lanes = 128
        w_mat = jnp.kron(jnp.eye(f, dtype=io_dtype), w_eff)  # (128, 128) blkdiag
    else:
        # TODO(synk): for very large D (>= 256) tile the output-feature dim
        # (256 on v6e/v7x, 128 on v5e) instead of kron; plain path kept here.
        f = 1
        lanes = D
        w_mat = w_eff

    rows = -(-B // f)  # logical rows of the repacked activation matrix

    # ---- tile sizing (generation-aware VMEM budget, padded-lane-aware) ------
    lanes_pad = _round_up(lanes, 128)
    row_bytes = lanes_pad * itemsize                       # one repacked row
    w_bytes = (_round_up(w_mat.shape[0], align)
               * _round_up(w_mat.shape[1], 128) * itemsize)

    phys_vmem = _physical_vmem_bytes()
    # Keep the double-buffered working set within ~60% of physical VMEM
    # (64 MiB/TC on v7x, 128 MiB on v5e/v6e).
    budget = int(phys_vmem * 0.6) - 2 * w_bytes - (2 << 20)
    per_row_ws = 4 * row_bytes                              # 2x x-tile + 2x y-tile
    cap = max(align, (budget // per_row_ws) // align * align)
    # Target >= ~4 MiB x tiles so per-step DMA dwarfs the ~0.35 us step cost.
    target = _round_up(max(1, (4 << 20) // row_bytes), align)
    tb = min(cap, target)
    if block_rows is not None:
        tb = min(cap, _round_up(max(1, block_rows), align))

    if rows <= tb:
        tb = rows                       # single tile; block == full array dims
        rows_pad = rows
    else:
        rows_pad = _round_up(rows, tb)  # exact multiple of the tile

    # Pad batch, repack to the lane-dense (rows_pad, lanes) layout.
    b_pad = rows_pad * f
    if b_pad != B:
        x = jnp.pad(x, ((0, b_pad - B), (0, 0)))
    x2 = x.reshape(rows_pad, lanes)

    # Padded-lane-aware scoped-VMEM limit (mandatory on v5e: default is 16 MiB).
    ws = 4 * tb * row_bytes + 2 * w_bytes + (2 << 20)
    vmem_limit = int(min(max(ws, 16 << 20),
                         min(int(phys_vmem * 0.75), 112 << 20)))

    cost = pl.CostEstimate(
        flops=2 * rows_pad * lanes * lanes,
        transcendentals=0,
        bytes_accessed=(2 * rows_pad * lanes + w_mat.size) * itemsize,
    )

    grid = (rows_pad // tb,)
    y2 = pl.pallas_call(
        _invertible_mm_kernel,
        out_shape=jax.ShapeDtypeStruct((rows_pad, lanes), io_dtype),
        grid=grid,
        in_specs=[
            pl.BlockSpec((tb, lanes), lambda i: (i, 0)),          # x: streamed
            pl.BlockSpec(w_mat.shape, lambda i: (0, 0)),          # W: resident
        ],
        out_specs=pl.BlockSpec((tb, lanes), lambda i: (i, 0)),
        compiler_params=pltpu.CompilerParams(
            dimension_semantics=("parallel",),
            vmem_limit_bytes=vmem_limit,
        ),
        cost_estimate=cost,
    )(x2, w_mat)

    y = y2.reshape(rows_pad * f, D)[:B]

    # logdet is a scalar repeated per batch row; broadcast in the wrapper.
    logdet = jnp.full((B, 1), logdet_scalar, dtype=jnp.float32)
    return y, logdet


# ----------------------------------------------------------------------------
# Pure-JAX reference (mirrors the PyTorch forward exactly)
# ----------------------------------------------------------------------------
def invertible_mm_ref(inputs, W, mode='direct'):
    B = inputs.shape[0]
    x32 = inputs.astype(jnp.float32)
    logabsdet = jnp.log(jnp.abs(jnp.linalg.det(W)))
    if mode == 'direct':
        return x32 @ W, jnp.full((B, 1), logabsdet, dtype=jnp.float32)
    return x32 @ jnp.linalg.inv(W), jnp.full((B, 1), -logabsdet,
                                             dtype=jnp.float32)


# ----------------------------------------------------------------------------
# Parameters (deterministic, mimics nn.init.orthogonal_)
# ----------------------------------------------------------------------------
def make_invertible_mm_params(key, num_inputs):
    a = jax.random.normal(key, (num_inputs, num_inputs), dtype=jnp.float32)
    q, r = jnp.linalg.qr(a)
    q = q * jnp.sign(jnp.diag(r))[None, :]
    return q.astype(jnp.float32)


if __name__ == "__main__":
    key = jax.random.PRNGKey(0)
    k_w, k_x, k_x2 = jax.random.split(key, 3)

    NUM_INPUTS = 8
    W = make_invertible_mm_params(k_w, NUM_INPUTS)

    # Small shape consistent with the module: [B, num_inputs]
    x = jax.random.normal(k_x, (2, NUM_INPUTS), dtype=jnp.float32)

    y, logdet = invertible_mm_forward(x, W, mode='direct')
    y = jax.block_until_ready(y)
    logdet = jax.block_until_ready(logdet)

    y_ref, logdet_ref = invertible_mm_ref(x, W, mode='direct')
    assert jnp.allclose(y, y_ref, atol=1e-5, rtol=1e-5)
    assert jnp.allclose(logdet, logdet_ref, atol=1e-5, rtol=1e-5)

    # inverse mode round-trips
    x_rec, neg_logdet = invertible_mm_forward(y, W, mode='inverse')
    x_rec = jax.block_until_ready(x_rec)
    assert jnp.allclose(x_rec, x, atol=1e-4, rtol=1e-4)
    assert jnp.allclose(neg_logdet, -logdet, atol=1e-5, rtol=1e-5)

    # larger batch exercising the lane-dense repack + multi-tile batch grid
    xb = jax.random.normal(k_x2, (512, NUM_INPUTS), dtype=jnp.float32)
    yb, ldb = invertible_mm_forward(xb, W, mode='direct', block_rows=8)
    yb = jax.block_until_ready(yb)
    yb_ref, ldb_ref = invertible_mm_ref(xb, W, mode='direct')
    assert jnp.allclose(yb, yb_ref, atol=1e-5, rtol=1e-5)
    assert jnp.allclose(ldb, ldb_ref, atol=1e-5, rtol=1e-5)

    # bf16 I/O path (halved HBM traffic on this bandwidth-bound op)
    xbf = xb.astype(jnp.bfloat16)
    ybf, _ = invertible_mm_forward(xbf, W, mode='direct')
    ybf = jax.block_until_ready(ybf)
    ybf_ref, _ = invertible_mm_ref(xbf, W, mode='direct')
    assert ybf.dtype == jnp.bfloat16
    assert jnp.allclose(ybf.astype(jnp.float32), ybf_ref, atol=5e-2, rtol=5e-2)

    print("KERNEL_OK")
</pallas_src>

<mosaic_0001>
module attributes {stable_mosaic.version = 11 : i64} {
  func.func @_invertible_mm_kernel(%arg0: i32, %arg1: memref<1x128xf32, #tpu.memory_space<vmem>>, %arg2: memref<128x128xf32, #tpu.memory_space<vmem>>, %arg3: memref<1x128xf32, #tpu.memory_space<vmem>>) attributes {dimension_semantics = [#tpu.dimension_semantics<parallel>], iteration_bounds = array<i64: 1>, scalar_prefetch = 0 : i64, scratch_operands = 0 : i64, tpu.core_type = #tpu.core_type<tc>, window_params = [{transform_indices = @transform_0, window_bounds = array<i64: 1, 128>}, {pipeline_mode = #tpu.pipeline_mode<synchronous>, transform_indices = @transform_1, window_bounds = array<i64: 128, 128>}, {transform_indices = @transform_2, window_bounds = array<i64: 1, 128>}]} {
    %c0 = arith.constant 0 : index
    %c0_0 = arith.constant 0 : index
    %0 = vector.load %arg1[%c0, %c0_0] : memref<1x128xf32, #tpu.memory_space<vmem>>, vector<1x128xf32>
    %c0_1 = arith.constant 0 : index
    %c0_2 = arith.constant 0 : index
    %1 = vector.load %arg2[%c0_1, %c0_2] : memref<128x128xf32, #tpu.memory_space<vmem>>, vector<128x128xf32>
    %cst = arith.constant dense<0.000000e+00> : vector<1x128xf32>
    %2 = tpu.matmul %0, %1, %cst {dimension_numbers = #tpu.dot_dimension_numbers<[1], [0], [0], [1], [0, 0, 1, 1], [], []>} : vector<1x128xf32>, vector<128x128xf32>, vector<1x128xf32> -> vector<1x128xf32>
    %c0_3 = arith.constant 0 : index
    %c0_4 = arith.constant 0 : index
    %3 = vector.load %arg3[%c0_3, %c0_4] : memref<1x128xf32, #tpu.memory_space<vmem>>, vector<1x128xf32>
    tpu.vector_store %arg3[%c0_3, %c0_4], %2 {strides = array<i32>} : memref<1x128xf32, #tpu.memory_space<vmem>>, vector<1x128xf32>,
    return
  }
  func.func @transform_0(%arg0: i32) -> (i32, i32) {
    %c0_i32 = arith.constant 0 : i32
    %c0_i32_0 = arith.constant 0 : i32
    return %arg0, %c0_i32 : i32, i32
  }
  func.func @transform_1(%arg0: i32) -> (i32, i32) {
    %c0_i32 = arith.constant 0 : i32
    %c0_i32_0 = arith.constant 0 : i32
    %c0_i32_1 = arith.constant 0 : i32
    return %c0_i32, %c0_i32_0 : i32, i32
  }
  func.func @transform_2(%arg0: i32) -> (i32, i32) {
    %c0_i32 = arith.constant 0 : i32
    %c0_i32_0 = arith.constant 0 : i32
    return %arg0, %c0_i32 : i32, i32
  }
}

</mosaic_0001>

<llo_original>
// kernel: tpu_custom_call.1
$region0: #{tpu_custom_call.1}
  #allocation0 [shape = 'u32[]', space=smem, size = 0x4, offset = 0x4, fixed_abs, tag = 'smem constant byte address 0x4 - core index']
  #allocation1 [shape = 'u32[144,128]{1,0:T(1,128)}', space=vmem, size = 0x12000, scoped, tag = 'internal scratch']
  %s0 = inlined_call_operand.hbm [shape: f32[1,128], index: 0, kind: input, shape index: {}]
  %s1 = inlined_call_operand.hbm [shape: f32[128,128], index: 1, kind: input, shape index: {}]
  %s2 = inlined_call_operand.hbm [shape: f32[1,128], index: 2, kind: output, shape index: {}]
  %s3 = sld [smem:[#allocation0]]
  $region26: #{tpu_custom_call.1} parent=0
    _
  %s5 = ssub.s32 1, %s3
  %s6 = scalar_select 0, %s5, %s3
  $region1: #{tpu_custom_call.1} parent=0
    #allocation2 [shape = 'u8[512]{0}', space=vmem, size = 0x400, scoped, tag = 'input window, operand 0, single buffered']
    #allocation3 [shape = 's32[1]{0}', space=sflag, size = 0x4, scoped, tag = 'scoped memory for tpu_custom_call.1']
    #allocation4 [shape = 's32[1]{0}', space=sflag, size = 0x4, scoped, tag = 'scoped memory for tpu_custom_call.1']
    #allocation5 [shape = 'u8[65536]{0}', space=vmem, size = 0x10000, scoped, tag = 'input window, operand 1, single buffered']
    #allocation6 [shape = 's32[1]{0}', space=sflag, size = 0x4, scoped, tag = 'scoped memory for tpu_custom_call.1']
    #allocation7 [shape = 'u8[512]{0}', space=vmem, size = 0x400, scoped, tag = 'output window, operand 0, single buffered']
    %7 = vsyncpa [#allocation3], 0
    %8 = vsyncpa [#allocation6], 0
    %9 = vsyncpa [#allocation4], 0
    // Predicated region
    $region2: #{tpu_custom_call.1} parent=1 // pred_check
      _
    $region3: #{tpu_custom_call.1} parent=1 // pred_check_branch
      %11 = sbr.rel (0) target = $region5
    $region4: #{tpu_custom_call.1} parent=1 // pred_region
      %s13 = ssub.s32 16, 16
      %14 = vsyncadd [#allocation3], %s13
      %s16 = sshll.u32 [#allocation2], 4
      %s17 = int_to_ptr.vmem [resolvable:$true] %s16
      %19 = dma.hbm_to_vmem [thread:$0]  %s0, 16, %s17, [#allocation3]
    $region5: #{tpu_custom_call.1} parent=1 // pred_fallthru
      _
    // Predicated region
    $region6: #{tpu_custom_call.1} parent=1 // pred_check
      _
    $region7: #{tpu_custom_call.1} parent=1 // pred_check_branch
      %21 = sbr.rel (0) target = $region9
    $region8: #{tpu_custom_call.1} parent=1 // pred_region
      %s23 = ssub.s32 2048, 2048
      %24 = vsyncadd [#allocation6], %s23
      %s25 = sshll.u32 [#allocation5], 4
      %s26 = int_to_ptr.vmem [resolvable:$true] %s25
      %31 = dma.hbm_to_vmem [thread:$0]  %s1, 2048, %s26, [#allocation6], 128, 128, 8
    $region9: #{tpu_custom_call.1} parent=1 // pred_fallthru
      _
    // Predicated region
    $region10: #{tpu_custom_call.1} parent=1 // pred_check
      _
    $region11: #{tpu_custom_call.1} parent=1 // pred_check_branch
      %33 = sbr.rel (0) target = $region13
    $region12: #{tpu_custom_call.1} parent=1 // pred_region
      %34 = dma.done [#allocation3], 16
    $region13: #{tpu_custom_call.1} parent=1 // pred_fallthru
      _
    // Predicated region
    $region14: #{tpu_custom_call.1} parent=1 // pred_check
      _
    $region15: #{tpu_custom_call.1} parent=1 // pred_check_branch
      %36 = sbr.rel (0) target = $region17
    $region16: #{tpu_custom_call.1} parent=1 // pred_region
      %37 = dma.done [#allocation6], 2048
    $region17: #{tpu_custom_call.1} parent=1 // pred_fallthru
      _
    %v38 = vld [vmem:[#allocation2] sm:$0x1]
    %v39 = vld [vmem:[#allocation5] sm:$0xff]
    %v40 = vld [vmem:[#allocation5 + $0x8] sm:$0xff]
    %v41 = vld [vmem:[#allocation5 + $0x10] sm:$0xff]
    %v42 = vld [vmem:[#allocation5 + $0x18] sm:$0xff]
    %v43 = vld [vmem:[#allocation5 + $0x20] sm:$0xff]
    %v44 = vld [vmem:[#allocation5 + $0x28] sm:$0xff]
    %v45 = vld [vmem:[#allocation5 + $0x30] sm:$0xff]
    %v46 = vld [vmem:[#allocation5 + $0x38] sm:$0xff]
    %v47 = vld [vmem:[#allocation5 + $0x40] sm:$0xff]
    %v48 = vld [vmem:[#allocation5 + $0x48] sm:$0xff]
    %v49 = vld [vmem:[#allocation5 + $0x50] sm:$0xff]
    %v50 = vld [vmem:[#allocation5 + $0x58] sm:$0xff]
    %v51 = vld [vmem:[#allocation5 + $0x60] sm:$0xff]
    %v52 = vld [vmem:[#allocation5 + $0x68] sm:$0xff]
    %v53 = vld [vmem:[#allocation5 + $0x70] sm:$0xff]
    %v54 = vld [vmem:[#allocation5 + $0x78] sm:$0xff]
    %55 = vmatprep.subr.mxu0 0.0
    %56 = vmatpush1.msra.mxu0 %v39
    %57 = vmatprep.subr.mxu0 0.0
    %58 = vmatpush1.msra.mxu0 %v40
    %59 = vmatprep.subr.mxu0 0.0
    %60 = vmatpush1.msra.mxu0 %v41
    %61 = vmatprep.subr.mxu0 0.0
    %62 = vmatpush1.msra.mxu0 %v42
    %63 = vmatprep.subr.mxu0 0.0
    %64 = vmatpush1.msra.mxu0 %v43
    %65 = vmatprep.subr.mxu0 0.0
    %66 = vmatpush1.msra.mxu0 %v44
    %67 = vmatprep.subr.mxu0 0.0
    %68 = vmatpush1.msra.mxu0 %v45
    %69 = vmatprep.subr.mxu0 0.0
    %70 = vmatpush1.msra.mxu0 %v46
    %71 = vmatprep.subr.mxu0 0.0
    %72 = vmatpush1.msra.mxu0 %v47
    %73 = vmatprep.subr.mxu0 0.0
    %74 = vmatpush1.msra.mxu0 %v48
    %75 = vmatprep.subr.mxu0 0.0
    %76 = vmatpush1.msra.mxu0 %v49
    %77 = vmatprep.subr.mxu0 0.0
    %78 = vmatpush1.msra.mxu0 %v50
    %79 = vmatprep.subr.mxu0 0.0
    %80 = vmatpush1.msra.mxu0 %v51
    %81 = vmatprep.subr.mxu0 0.0
    %82 = vmatpush1.msra.mxu0 %v52
    %83 = vmatprep.subr.mxu0 0.0
    %84 = vmatpush1.msra.mxu0 %v53
    %85 = vmatprep.subr.mxu0 0.0
    %86 = vmatpush1.msra.mxu0 %v54
    %87 = vmatprep.subr.mxu0 0.0
    %88 = vmatpush1.msra.mxu0 0.0
    %89 = vmatprep.subr.mxu0 0.0
    %90 = vmatpush1.msra.mxu0 0.0
    %91 = vmatprep.subr.mxu0 0.0
    %92 = vmatpush1.msra.mxu0 0.0
    %93 = vmatprep.subr.mxu0 0.0
    %94 = vmatpush1.msra.mxu0 0.0
    %95 = vmatprep.subr.mxu0 0.0
    %96 = vmatpush1.msra.mxu0 0.0
    %97 = vmatprep.subr.mxu0 0.0
    %98 = vmatpush1.msra.mxu0 0.0
    %99 = vmatprep.subr.mxu0 0.0
    %100 = vmatpush1.msra.mxu0 0.0
    %101 = vmatprep.subr.mxu0 0.0
    %102 = vmatpush1.msra.mxu0 0.0
    %103 = vmatprep.subr.mxu0 0.0
    %104 = vmatpush1.msra.mxu0 0.0
    %105 = vmatprep.subr.mxu0 0.0
    %106 = vmatpush1.msra.mxu0 0.0
    %107 = vmatprep.subr.mxu0 0.0
    %108 = vmatpush1.msra.mxu0 0.0
    %109 = vmatprep.subr.mxu0 0.0
    %110 = vmatpush1.msra.mxu0 0.0
    %111 = vmatprep.subr.mxu0 0.0
    %112 = vmatpush1.msra.mxu0 0.0
    %113 = vmatprep.subr.mxu0 0.0
    %114 = vmatpush1.msra.mxu0 0.0
    %115 = vmatprep.subr.mxu0 0.0
    %116 = vmatpush1.msra.mxu0 0.0
    %117 = vmatprep.subr.mxu0 0.0
    %118 = vmatpush1.msra.mxu0 0.0
    %119 = vmatprep.mubr.f32.mxu0 0.0
    %120 = vmatmul.mubr.f32.gmra.mrb[0].mxu0 %v38
    %v121 = vpop.f32.mrb[0].mxu0
    %v122 = vadd.f32 0.0, %v121
    %v123 = vpop.f32.mrb[0].mxu0
    %124 = vdwg.mxu0
    %125 = vst [vmem:[#allocation7] sm:$0x1] %v122
    // Predicated region
    $region18: #{tpu_custom_call.1} parent=1 // pred_check
      _
    $region19: #{tpu_custom_call.1} parent=1 // pred_check_branch
      %127 = sbr.rel (0) target = $region21
    $region20: #{tpu_custom_call.1} parent=1 // pred_region
      %s129 = ssub.s32 16, 16
      %130 = vsyncadd [#allocation4], %s129
      %s132 = sshll.u32 [#allocation7], 4
      %s133 = int_to_ptr.vmem [resolvable:$true] %s132
      %135 = dma.vmem_to_hbm [thread:$0]  %s133, 16, %s2, [#allocation4]
    $region21: #{tpu_custom_call.1} parent=1 // pred_fallthru
      _
    // Predicated region
    $region22: #{tpu_custom_call.1} parent=1 // pred_check
      _
    $region23: #{tpu_custom_call.1} parent=1 // pred_check_branch
      %137 = sbr.rel (0) target = $region25
    $region24: #{tpu_custom_call.1} parent=1 // pred_region
      %138 = dma.done [#allocation4], 16
    $region25: #{tpu_custom_call.1} parent=1 // pred_fallthru
      _
    %139 = vsyncpa [#allocation3], 1
    %140 = vsyncpa [#allocation6], 1
    %141 = vsyncpa [#allocation4], 1

</llo_original>
